<compile_context>
chip_gen: v7x
topology: tpu7x:2x2x1
jax: 0.10.0
libtpu: 0.0.40
codegen_flags: <defaults>
</compile_context>

<pallas_src>
import functools

import jax
import jax.numpy as jnp
from jax.experimental import pallas as pl
from jax.experimental.pallas import tpu as pltpu

EPS = 1e-5


def _arima_kernel(x_ref, a_ref, c_ref, o_ref):
    # x_ref: [L, N]   a_ref: [P, L]   c_ref: [P, N]   o_ref: [P, N]
    x = x_ref[...].astype(jnp.float32)

    # ---- RevIN 'norm' (affine=False): stats over time (axis 0 = sublanes) ----
    mean = jnp.mean(x, axis=0, keepdims=True)            # [1, N]
    xc = x - mean
    var = jnp.mean(xc * xc, axis=0, keepdims=True)       # unbiased=False
    inv_std = jax.lax.rsqrt(var + EPS)                   # EUP slot
    stdev = (var + EPS) * inv_std                        # == sqrt(var+EPS)
    xn = xc * inv_std                                    # [L, N]

    # ---- folded (diff^d -> AR linear -> inverse diff^d): one MXU matmul ----
    f = jnp.dot(a_ref[...], xn, preferred_element_type=jnp.float32)   # [P, N]

    # ---- RevIN 'denorm' (affine=False) + single lane-dense store ----
    o_ref[...] = ((f + c_ref[...]) * stdev + mean).astype(o_ref.dtype)


def _fold_affine(ar_weight, ar_bias, seq_len, pred_len, d):
    """Fold diff^d -> Linear(seq_len->pred_len) -> inverse_diff^d into (A, c).

    For one (batch, channel) RevIN-normalized series z in R^L the module computes
    an affine map g(z) in R^P (differencing, the linear layer, cumsum and
    concat/slicing are all linear). Extract A [P, L] and c [P] with
    g(z) = A @ z + c by evaluating g on the zero series and on the rows of the
    identity. Weights-only work, done once outside the kernel.
    """
    L, P = seq_len, pred_len
    w = ar_weight.astype(jnp.float32)
    b = ar_bias.astype(jnp.float32)
    Z = jnp.concatenate([jnp.zeros((1, L), jnp.float32),
                         jnp.eye(L, dtype=jnp.float32)], axis=0)        # [L+1, L]
    ds = Z
    for _ in range(d):                                   # forward differencing
        ds = jnp.concatenate([ds[:, :1], ds[:, 1:] - ds[:, :-1]], axis=1)
    out = ds @ w.T + b                                                   # [L+1, P]
    fd = out
    for _ in range(d):                                   # inverse differencing
        fd = jnp.concatenate([Z, Z[:, -1:] + jnp.cumsum(fd, axis=1)], axis=1)
    g = fd[:, -P:]                                                       # [L+1, P]
    c = g[0]                                                             # [P]
    A = (g[1:] - c[None, :]).T                                           # [P, L]
    return A, c


@functools.partial(jax.jit, static_argnames=("d", "pred_len"))
def arima_forecast(x_enc, ar_weight, ar_bias, *, d, pred_len):
    """x_enc: [B, L, C]  ar_weight: [P, L]  ar_bias: [P]  ->  [B, P, C]"""
    B, L, C = x_enc.shape
    P = pred_len
    N = B * C

    A, c = _fold_affine(ar_weight, ar_bias, L, P, d)
    c_bc = jnp.broadcast_to(c[:, None], (P, N))          # pre-broadcast bias

    # Layout plumbing in the wrapper (cheap XLA layout ops, not in-kernel XLU work):
    # [B, L, C] -> [L, B, C] -> [L, B*C]; time on sublanes, (batch, channel) on lanes.
    x2 = jnp.transpose(x_enc, (1, 0, 2)).reshape(L, N)

    # Tile over the lane axis when it is large and cleanly tileable; otherwise one block.
    TN = 512
    if N % TN == 0 and N > TN:
        tn, grid_n = TN, N // TN
    else:
        tn, grid_n = N, 1

    out2 = pl.pallas_call(
        _arima_kernel,
        out_shape=jax.ShapeDtypeStruct((P, N), x_enc.dtype),
        grid=(grid_n,),
        in_specs=[
            pl.BlockSpec((L, tn), lambda j: (0, j)),
            pl.BlockSpec((P, L), lambda j: (0, 0)),       # A stays resident
            pl.BlockSpec((P, tn), lambda j: (0, j)),
        ],
        out_specs=pl.BlockSpec((P, tn), lambda j: (0, j)),
        compiler_params=pltpu.CompilerParams(
            dimension_semantics=("parallel",)),
    )(x2, A, c_bc)

    # [P, B*C] -> [B, P, C]
    return jnp.transpose(out2.reshape(P, B, C), (1, 0, 2))


def _reference(x_enc, ar_weight, ar_bias, *, d, pred_len):
    """Pure-jnp mirror of the PyTorch forward (for verification)."""
    mean = jnp.mean(x_enc, axis=1, keepdims=True)                     # [B,1,C]
    stdev = jnp.sqrt(jnp.var(x_enc, axis=1, keepdims=True) + EPS)     # [B,1,C]
    xn = (x_enc - mean) / stdev
    s = jnp.transpose(xn, (0, 2, 1))                                  # [B,C,L]
    ds = s
    for _ in range(d):
        ds = jnp.concatenate([ds[:, :, :1], ds[:, :, 1:] - ds[:, :, :-1]], axis=2)
    out = jnp.einsum('bcl,pl->bcp', ds, ar_weight) + ar_bias          # [B,C,P]
    fd = out
    for _ in range(d):
        fd = jnp.concatenate([s, s[:, :, -1:] + jnp.cumsum(fd, axis=2)], axis=2)
    fd = fd[:, :, -pred_len:]
    fd = jnp.transpose(fd, (0, 2, 1))                                 # [B,P,C]
    return fd * stdev + mean


if __name__ == "__main__":
    # Config: seq_len=16, pred_len=8, enc_in=4, d=1, features='M' (RevIN affine=False)
    # (p and q from the config are unused in the forward pass.)
    B, L, C, P, D = 2, 16, 4, 8, 1

    key = jax.random.PRNGKey(0)
    kx, kw, kb = jax.random.split(key, 3)
    x_enc = jax.random.normal(kx, (B, L, C), dtype=jnp.float32)
    ar_weight = jax.random.normal(kw, (P, L), dtype=jnp.float32) * (1.0 / L) ** 0.5
    ar_bias = jax.random.normal(kb, (P,), dtype=jnp.float32) * 0.01

    out = arima_forecast(x_enc, ar_weight, ar_bias, d=D, pred_len=P)
    out = jax.block_until_ready(out)

    ref = _reference(x_enc, ar_weight, ar_bias, d=D, pred_len=P)
    assert out.shape == (B, P, C)
    assert jnp.allclose(out, ref, atol=1e-4, rtol=1e-4), "mismatch vs reference"

    print("KERNEL_OK")
</pallas_src>

<mosaic_0001>
module attributes {stable_mosaic.version = 11 : i64} {
  func.func @_arima_kernel(%arg0: i32, %arg1: memref<16x8xf32, #tpu.memory_space<vmem>>, %arg2: memref<8x16xf32, #tpu.memory_space<vmem>>, %arg3: memref<8x8xf32, #tpu.memory_space<vmem>>, %arg4: memref<8x8xf32, #tpu.memory_space<vmem>>) attributes {dimension_semantics = [#tpu.dimension_semantics<parallel>], iteration_bounds = array<i64: 1>, scalar_prefetch = 0 : i64, scratch_operands = 0 : i64, tpu.core_type = #tpu.core_type<tc>, window_params = [{transform_indices = @transform_0, window_bounds = array<i64: 16, 8>}, {pipeline_mode = #tpu.pipeline_mode<synchronous>, transform_indices = @transform_1, window_bounds = array<i64: 8, 16>}, {transform_indices = @transform_2, window_bounds = array<i64: 8, 8>}, {transform_indices = @transform_3, window_bounds = array<i64: 8, 8>}]} {
    %c0 = arith.constant 0 : index
    %c0_0 = arith.constant 0 : index
    %0 = vector.load %arg1[%c0, %c0_0] : memref<16x8xf32, #tpu.memory_space<vmem>>, vector<16x8xf32>
    %cst = arith.constant dense<0.000000e+00> : vector<8xf32>
    %1 = vector.multi_reduction <add>, %0, %cst [0] : vector<16x8xf32> to vector<8xf32>
    %2 = vector.shape_cast %1 : vector<8xf32> to vector<1x8xf32>
    %cst_1 = arith.constant 1.600000e+01 : f32
    %3 = vector.broadcast %cst_1 : f32 to vector<1x8xf32>
    %4 = arith.divf %2, %3 : vector<1x8xf32>
    %5 = vector.broadcast %4 : vector<1x8xf32> to vector<16x8xf32>
    %6 = arith.subf %0, %5 : vector<16x8xf32>
    %7 = arith.mulf %6, %6 : vector<16x8xf32>
    %cst_2 = arith.constant dense<0.000000e+00> : vector<8xf32>
    %8 = vector.multi_reduction <add>, %7, %cst_2 [0] : vector<16x8xf32> to vector<8xf32>
    %9 = vector.shape_cast %8 : vector<8xf32> to vector<1x8xf32>
    %cst_3 = arith.constant 1.600000e+01 : f32
    %10 = vector.broadcast %cst_3 : f32 to vector<1x8xf32>
    %11 = arith.divf %9, %10 : vector<1x8xf32>
    %cst_4 = arith.constant 9.99999974E-6 : f32
    %12 = vector.broadcast %cst_4 : f32 to vector<1x8xf32>
    %13 = arith.addf %11, %12 : vector<1x8xf32>
    %14 = math.rsqrt %13 : vector<1x8xf32>
    %cst_5 = arith.constant 9.99999974E-6 : f32
    %15 = vector.broadcast %cst_5 : f32 to vector<1x8xf32>
    %16 = arith.addf %11, %15 : vector<1x8xf32>
    %17 = arith.mulf %16, %14 : vector<1x8xf32>
    %18 = vector.broadcast %14 : vector<1x8xf32> to vector<16x8xf32>
    %19 = arith.mulf %6, %18 : vector<16x8xf32>
    %c0_6 = arith.constant 0 : index
    %c0_7 = arith.constant 0 : index
    %20 = vector.load %arg2[%c0_6, %c0_7] : memref<8x16xf32, #tpu.memory_space<vmem>>, vector<8x16xf32>
    %cst_8 = arith.constant dense<0.000000e+00> : vector<8x8xf32>
    %21 = tpu.matmul %20, %19, %cst_8 {dimension_numbers = #tpu.dot_dimension_numbers<[1], [0], [0], [1], [0, 0, 1, 1], [], []>} : vector<8x16xf32>, vector<16x8xf32>, vector<8x8xf32> -> vector<8x8xf32>
    %c0_9 = arith.constant 0 : index
    %c0_10 = arith.constant 0 : index
    %22 = vector.load %arg3[%c0_9, %c0_10] : memref<8x8xf32, #tpu.memory_space<vmem>>, vector<8x8xf32>
    %23 = arith.addf %21, %22 : vector<8x8xf32>
    %24 = vector.broadcast %17 : vector<1x8xf32> to vector<8x8xf32>
    %25 = arith.mulf %23, %24 : vector<8x8xf32>
    %26 = vector.broadcast %4 : vector<1x8xf32> to vector<8x8xf32>
    %27 = arith.addf %25, %26 : vector<8x8xf32>
    %c0_11 = arith.constant 0 : index
    %c0_12 = arith.constant 0 : index
    %28 = vector.load %arg4[%c0_11, %c0_12] : memref<8x8xf32, #tpu.memory_space<vmem>>, vector<8x8xf32>
    tpu.vector_store %arg4[%c0_11, %c0_12], %27 {strides = array<i32>} : memref<8x8xf32, #tpu.memory_space<vmem>>, vector<8x8xf32>,
    return
  }
  func.func @transform_0(%arg0: i32) -> (i32, i32) {
    %c0_i32 = arith.constant 0 : i32
    %c0_i32_0 = arith.constant 0 : i32
    return %c0_i32, %arg0 : i32, i32
  }
  func.func @transform_1(%arg0: i32) -> (i32, i32) {
    %c0_i32 = arith.constant 0 : i32
    %c0_i32_0 = arith.constant 0 : i32
    %c0_i32_1 = arith.constant 0 : i32
    return %c0_i32, %c0_i32_0 : i32, i32
  }
  func.func @transform_2(%arg0: i32) -> (i32, i32) {
    %c0_i32 = arith.constant 0 : i32
    %c0_i32_0 = arith.constant 0 : i32
    return %c0_i32, %arg0 : i32, i32
  }
  func.func @transform_3(%arg0: i32) -> (i32, i32) {
    %c0_i32 = arith.constant 0 : i32
    %c0_i32_0 = arith.constant 0 : i32
    return %c0_i32, %arg0 : i32, i32
  }
}

</mosaic_0001>

<llo_original>
// kernel: arima_forecast.1
$region0: #{arima_forecast.1}
  #allocation0 [shape = 'u32[]', space=smem, size = 0x4, offset = 0x4, fixed_abs, tag = 'smem constant byte address 0x4 - core index']
  #allocation1 [shape = 'u32[144,128]{1,0:T(1,128)}', space=vmem, size = 0x12000, scoped, tag = 'internal scratch']
  %s0 = inlined_call_operand.vmem [shape: f32[16,8], index: 0, kind: input, shape index: {}]
  %s1 = inlined_call_operand.vmem [shape: f32[8,16], index: 1, kind: input, shape index: {}]
  %s2 = inlined_call_operand.vmem [shape: f32[8,8], index: 2, kind: input, shape index: {}]
  %s3 = inlined_call_operand.vmem [shape: f32[8,8], index: 3, kind: output, shape index: {}]
  %s4 = sld [smem:[#allocation0]]
  $region22: #{arima_forecast.1} parent=0
    _
  %s6 = ssub.s32 1, %s4
  %s7 = scalar_select 0, %s6, %s4
  // Predicated region
  $region2: #{arima_forecast.1} parent=0 // pred_check
    _
  $region3: #{arima_forecast.1} parent=0 // pred_check_branch
    %9 = sbr.rel (0) target = $region5
  $region4: #{arima_forecast.1} parent=0 // pred_region
    _
  $region5: #{arima_forecast.1} parent=0 // pred_fallthru
    _
  // Predicated region
  $region6: #{arima_forecast.1} parent=0 // pred_check
    _
  $region7: #{arima_forecast.1} parent=0 // pred_check_branch
    %11 = sbr.rel (0) target = $region9
  $region8: #{arima_forecast.1} parent=0 // pred_region
    _
  $region9: #{arima_forecast.1} parent=0 // pred_fallthru
    _
  // Predicated region
  $region10: #{arima_forecast.1} parent=0 // pred_check
    _
  $region11: #{arima_forecast.1} parent=0 // pred_check_branch
    %13 = sbr.rel (0) target = $region13
  $region12: #{arima_forecast.1} parent=0 // pred_region
    _
  $region13: #{arima_forecast.1} parent=0 // pred_fallthru
    _
  %v14 = vld [vmem:[%s0] sm:$0xff]
  %v15 = vld [vmem:[%s0 + $0x8] sm:$0xff]
  %vm16 = vcmask 64512
  %v17 = vsel %vm16, %v14, 0.0
  %v18 = vsel %vm16, %v15, 0.0
  %v19 = vadd.f32 %v17, %v18
  %v20 = vrot.slane %v19, 4
  %v21 = vadd.f32 %v19, %v20
  %v22 = vrot.slane %v21, 2
  %v23 = vadd.f32 %v21, %v22
  %v24 = vrot.slane %v23, 1
  %v25 = vadd.f32 %v23, %v24
  %v26 = vrcp.pop 16.0
  %v27 = vmul.f32 %v25, %v26
  %v28 = vsub.f32 %v14, %v27
  %v29 = vsub.f32 %v15, %v27
  %v30 = vmul.f32 %v28, %v28
  %v31 = vmul.f32 %v29, %v29
  %v32 = vsel %vm16, %v30, 0.0
  %v33 = vsel %vm16, %v31, 0.0
  %v34 = vadd.f32 %v32, %v33
  %v35 = vrot.slane %v34, 4
  %v36 = vadd.f32 %v34, %v35
  %v37 = vrot.slane %v36, 2
  %v38 = vadd.f32 %v36, %v37
  %v39 = vrot.slane %v38, 1
  %v40 = vadd.f32 %v38, %v39
  %v41 = vmul.f32 %v40, %v26
  %v42 = vadd.f32 %v41, 1e-05
  %v43 = vrsqrt.pop %v42
  %v44 = vmul.f32 %v42, %v43
  %v45 = vmul.f32 %v28, %v43
  %v46 = vmul.f32 %v29, %v43
  %v47 = vld [vmem:[%s1] sm:$0xff]
  %v48 = vld [vmem:[%s2] sm:$0xff]
  %vm49 = vcmask 130048
  %v51 = vsel %vm49, %v47, 0
  %53 = vmatprep.subr.mxu0 0.0
  %54 = vmatpush1.msra.mxu0 %v45
  %55 = vmatprep.subr.mxu0 0.0
  %56 = vmatpush1.msra.mxu0 %v46
  %57 = vmatprep.subr.mxu0 0.0
  %58 = vmatpush1.msra.mxu0 0.0
  %59 = vmatprep.subr.mxu0 0.0
  %60 = vmatpush1.msra.mxu0 0.0
  %61 = vmatprep.subr.mxu0 0.0
  %62 = vmatpush1.msra.mxu0 0.0
  %63 = vmatprep.subr.mxu0 0.0
  %64 = vmatpush1.msra.mxu0 0.0
  %65 = vmatprep.subr.mxu0 0.0
  %66 = vmatpush1.msra.mxu0 0.0
  %67 = vmatprep.subr.mxu0 0.0
  %68 = vmatpush1.msra.mxu0 0.0
  %69 = vmatprep.subr.mxu0 0.0
  %70 = vmatpush1.msra.mxu0 0.0
  %71 = vmatprep.subr.mxu0 0.0
  %72 = vmatpush1.msra.mxu0 0.0
  %73 = vmatprep.subr.mxu0 0.0
  %74 = vmatpush1.msra.mxu0 0.0
  %75 = vmatprep.subr.mxu0 0.0
  %76 = vmatpush1.msra.mxu0 0.0
  %77 = vmatprep.subr.mxu0 0.0
  %78 = vmatpush1.msra.mxu0 0.0
  %79 = vmatprep.subr.mxu0 0.0
  %80 = vmatpush1.msra.mxu0 0.0
  %81 = vmatprep.subr.mxu0 0.0
  %82 = vmatpush1.msra.mxu0 0.0
  %83 = vmatprep.subr.mxu0 0.0
  %84 = vmatpush1.msra.mxu0 0.0
  %85 = vmatprep.subr.mxu0 0.0
  %86 = vmatpush1.msra.mxu0 0.0
  %87 = vmatprep.subr.mxu0 0.0
  %88 = vmatpush1.msra.mxu0 0.0
  %89 = vmatprep.subr.mxu0 0.0
  %90 = vmatpush1.msra.mxu0 0.0
  %91 = vmatprep.subr.mxu0 0.0
  %92 = vmatpush1.msra.mxu0 0.0
  %93 = vmatprep.subr.mxu0 0.0
  %94 = vmatpush1.msra.mxu0 0.0
  %95 = vmatprep.subr.mxu0 0.0
  %96 = vmatpush1.msra.mxu0 0.0
  %97 = vmatprep.subr.mxu0 0.0
  %98 = vmatpush1.msra.mxu0 0.0
  %99 = vmatprep.subr.mxu0 0.0
  %100 = vmatpush1.msra.mxu0 0.0
  %101 = vmatprep.subr.mxu0 0.0
  %102 = vmatpush1.msra.mxu0 0.0
  %103 = vmatprep.subr.mxu0 0.0
  %104 = vmatpush1.msra.mxu0 0.0
  %105 = vmatprep.subr.mxu0 0.0
  %106 = vmatpush1.msra.mxu0 0.0
  %107 = vmatprep.subr.mxu0 0.0
  %108 = vmatpush1.msra.mxu0 0.0
  %109 = vmatprep.subr.mxu0 0.0
  %110 = vmatpush1.msra.mxu0 0.0
  %111 = vmatprep.subr.mxu0 0.0
  %112 = vmatpush1.msra.mxu0 0.0
  %113 = vmatprep.subr.mxu0 0.0
  %114 = vmatpush1.msra.mxu0 0.0
  %115 = vmatprep.subr.mxu0 0.0
  %116 = vmatpush1.msra.mxu0 0.0
  %117 = vmatprep.mubr.f32.mxu0 0.0
  %118 = vmatmul.mubr.f32.gmra.mrb[0].mxu0 %v51
  %v119 = vpop.f32.mrb[0].mxu0
  %v120 = vadd.f32 %v48, %v119
  %v121 = vpop.f32.mrb[0].mxu0
  %122 = vdwg.mxu0
  %v123 = vmul.f32 %v120, %v44
  %v124 = vadd.f32 %v123, %v27
  %125 = vst.msk [vmem:[%s3] sm:$0xff] %vm16, %v124
  // Predicated region
  $region14: #{arima_forecast.1} parent=0 // pred_check
    _
  $region15: #{arima_forecast.1} parent=0 // pred_check_branch
    %127 = sbr.rel (0) target = $region17
  $region16: #{arima_forecast.1} parent=0 // pred_region
    _
  $region17: #{arima_forecast.1} parent=0 // pred_fallthru
    _
  // Predicated region
  $region18: #{arima_forecast.1} parent=0 // pred_check
    _
  $region19: #{arima_forecast.1} parent=0 // pred_check_branch
    %129 = sbr.rel (0) target = $region21
  $region20: #{arima_forecast.1} parent=0 // pred_region
    _
  $region21: #{arima_forecast.1} parent=0 // pred_fallthru
    _

</llo_original>
